<compile_context>
chip_gen: v5e
topology: v5e:2x2
jax: 0.10.0
libtpu: 0.0.40
codegen_flags: <defaults>
</compile_context>

<pallas_src>
import math

import jax
import jax.numpy as jnp
from jax.experimental import pallas as pl
from jax.experimental.pallas import tpu as pltpu


# Per-tile VMEM budget (bytes): 2 arrays (in + out) x 2 pipeline buffers x
# 4 MiB = 16 MiB total, safe on every generation incl. v7x (64 MiB physical).
_TILE_BYTES = 4 * 1024 * 1024
_VMEM_LIMIT_BYTES = 32 * 1024 * 1024


def _copy_kernel(x_ref, o_ref):
    # Pure lane-dense tile copy; the flatten itself happened (for free) in the
    # wrapper via jnp.reshape.
    o_ref[...] = x_ref[...]


def _pick_tile(full: int, align: int, cap_elems: int) -> int:
    """Tile size along one dim: a multiple of `align` (or == full if tiny).

    Prefers an aligned tile that divides `full` exactly; otherwise returns the
    budget-capped aligned tile and relies on pl.cdiv + Pallas masking for the
    partial last block (block shapes need not divide the array).
    """
    if full <= align:
        return full  # full-extent block is always legal
    cap = max(align, min(cap_elems, full))
    t = (cap // align) * align
    d = t
    while d >= align:
        if full % d == 0:
            return d
        d -= align
    return t  # no aligned divisor: masked partial last block


def _lane_dense_cols(total: int, max_cols: int = 65536):
    """Largest multiple-of-128 divisor of `total` that is <= max_cols."""
    if total % 128 != 0:
        return None
    q = total // 128
    for g in range(min(q, max_cols // 128), 0, -1):
        if q % g == 0:
            return 128 * g
    return 128


def _tiled_copy_2d(x2d: jax.Array) -> jax.Array:
    """Tiled, auto-pipelined 2D memcpy of a lane-friendly (rows, cols) view."""
    rows, cols = x2d.shape
    itemsize = jnp.dtype(x2d.dtype).itemsize
    # Sublane packing: 8 for 32-bit, 16 for bf16, 32 for int8.
    sublane = 8 * max(1, 4 // itemsize)

    # Column tile: lane-dense multiple of 128 (or full cols if cols < 128).
    tile_cols = _pick_tile(cols, 128, _TILE_BYTES // (sublane * itemsize))
    # Row tile: grow until the ~4 MiB per-tile byte budget (no artificial cap).
    rows_cap = max(sublane, _TILE_BYTES // (tile_cols * itemsize))
    tile_rows = _pick_tile(rows, sublane, rows_cap)

    grid_r = pl.cdiv(rows, tile_rows)
    grid_c = pl.cdiv(cols, tile_cols)

    # Guarantee >= 2 parallel grid steps so both v7x TensorCores (and their
    # DMA streams) are engaged; harmless on single-TC v5e/v6e.
    if grid_r * grid_c < 2:
        if tile_rows >= 2 * sublane:
            tile_rows = max(sublane, ((tile_rows // 2) // sublane) * sublane)
        elif tile_cols >= 2 * 128:
            tile_cols = max(128, ((tile_cols // 2) // 128) * 128)
        grid_r = pl.cdiv(rows, tile_rows)
        grid_c = pl.cdiv(cols, tile_cols)

    cost = pl.CostEstimate(
        flops=0,
        transcendentals=0,
        bytes_accessed=2 * rows * cols * itemsize,  # one read + one write
    )

    return pl.pallas_call(
        _copy_kernel,
        out_shape=jax.ShapeDtypeStruct((rows, cols), x2d.dtype),
        grid=(grid_r, grid_c),
        in_specs=[pl.BlockSpec((tile_rows, tile_cols), lambda i, j: (i, j))],
        out_specs=pl.BlockSpec((tile_rows, tile_cols), lambda i, j: (i, j)),
        compiler_params=pltpu.CompilerParams(
            dimension_semantics=("parallel", "parallel"),
            vmem_limit_bytes=_VMEM_LIMIT_BYTES,
        ),
        cost_estimate=cost,
    )(x2d)


def flatten_copy(x: jax.Array) -> jax.Array:
    """Explicit materialized flatten: new (N, K) buffer via a Pallas memcpy."""
    n = x.shape[0]
    k = int(math.prod(x.shape[1:])) if x.ndim > 1 else 1
    total = n * k
    x2d = jnp.reshape(x, (n, k))  # metadata-only

    if k % 128 == 0 and k > 0:
        view_shape = (n, k)
    else:
        cols = _lane_dense_cols(total)
        view_shape = (total // cols, cols) if cols is not None else (n, k)

    y = _tiled_copy_2d(jnp.reshape(x2d, view_shape))  # metadata-only re-view
    return jnp.reshape(y, (n, k))


def flatten(x: jax.Array, materialize: bool = False) -> jax.Array:
    """Pallas/JAX equivalent of torch Flatten: (N, ...) -> (N, prod(...)).

    Default is the zero-copy metadata reshape (a contiguous flatten moves zero
    bytes — matches torch .view semantics).  Pass materialize=True to force an
    explicit HBM copy through the Pallas kernel.
    """
    if not materialize:
        return jnp.reshape(x, (x.shape[0], -1))
    return flatten_copy(x)


if __name__ == "__main__":
    key = jax.random.PRNGKey(0)

    # NCHW input consistent with a conv-net feature map.
    x = jax.random.normal(key, (2, 4, 16, 16), dtype=jnp.float32)
    ref = x.reshape(2, -1)

    # Primary zero-copy path.
    y0 = jax.block_until_ready(flatten(x))
    assert y0.shape == (2, 4 * 16 * 16) and y0.dtype == x.dtype
    assert jnp.array_equal(y0, ref), "zero-copy flatten mismatch"

    # Pallas kernel (materialized copy) path.
    y1 = jax.block_until_ready(flatten(x, materialize=True))
    assert y1.shape == (2, 4 * 16 * 16) and y1.dtype == x.dtype
    assert jnp.array_equal(y1, ref), "pallas flatten mismatch (aligned K)"

    # K not a multiple of 128 (exercises lane-dense re-view / full-dim blocks).
    x2 = jax.random.normal(jax.random.PRNGKey(1), (2, 3, 5, 5), dtype=jnp.float32)
    y2 = jax.block_until_ready(flatten(x2, materialize=True))
    assert jnp.array_equal(y2, x2.reshape(2, -1)), "pallas flatten mismatch (unaligned K)"

    # Batch not a multiple of 8, K a multiple of 128 (masked / split tiling).
    x3 = jax.random.normal(jax.random.PRNGKey(2), (6, 8, 16, 16), dtype=jnp.float32)
    y3 = jax.block_until_ready(flatten(x3, materialize=True))
    assert jnp.array_equal(y3, x3.reshape(6, -1)), "pallas flatten mismatch (unaligned N)"

    print("KERNEL_OK")
</pallas_src>

<mosaic_0001>
module attributes {stable_mosaic.version = 11 : i64} {
  func.func @_copy_kernel(%arg0: i32, %arg1: i32, %arg2: memref<2x512xf32, #tpu.memory_space<vmem>>, %arg3: memref<2x512xf32, #tpu.memory_space<vmem>>) attributes {dimension_semantics = [#tpu.dimension_semantics<parallel>, #tpu.dimension_semantics<parallel>], iteration_bounds = array<i64: 1, 2>, scalar_prefetch = 0 : i64, scratch_operands = 0 : i64, tpu.core_type = #tpu.core_type<tc>, window_params = [{transform_indices = @transform_0, window_bounds = array<i64: 2, 512>}, {transform_indices = @transform_1, window_bounds = array<i64: 2, 512>}]} {
    %c0 = arith.constant 0 : index
    %c0_0 = arith.constant 0 : index
    %0 = vector.load %arg2[%c0, %c0_0] : memref<2x512xf32, #tpu.memory_space<vmem>>, vector<2x512xf32>
    %c0_1 = arith.constant 0 : index
    %c0_2 = arith.constant 0 : index
    %1 = vector.load %arg3[%c0_1, %c0_2] : memref<2x512xf32, #tpu.memory_space<vmem>>, vector<2x512xf32>
    tpu.vector_store %arg3[%c0_1, %c0_2], %0 {strides = array<i32>} : memref<2x512xf32, #tpu.memory_space<vmem>>, vector<2x512xf32>,
    return
  }
  func.func @transform_0(%arg0: i32, %arg1: i32) -> (i32, i32) {
    %c0_i32 = arith.constant 0 : i32
    return %arg0, %arg1 : i32, i32
  }
  func.func @transform_1(%arg0: i32, %arg1: i32) -> (i32, i32) {
    %c0_i32 = arith.constant 0 : i32
    return %arg0, %arg1 : i32, i32
  }
}

</mosaic_0001>

<llo_original>
// kernel: tpu_custom_call.1
$region0: #{tpu_custom_call.1}
  #allocation0 [shape = 'u32[]', space=smem, size = 0x4, offset = 0x4, fixed_abs, tag = 'smem constant byte address 0x4 - core index']
  #allocation1 [shape = 'u32[72,128]{1,0:T(1,128)}', space=vmem, size = 0x9000, scoped, tag = 'internal scratch']
  %s0 = inlined_call_operand.hbm [shape: f32[2,1024], index: 0, kind: input, shape index: {}]
  %s1 = inlined_call_operand.hbm [shape: f32[2,1024], index: 1, kind: output, shape index: {}]
  %s2 = sld [smem:[#allocation0]]
  $region41: #{tpu_custom_call.1} parent=0
    _
  %s4 = ssub.s32 1, %s2
  %s5 = scalar_select 0, %s4, %s2
  $region1: #{tpu_custom_call.1} parent=0
    #allocation2 [shape = 'u8[8192]{0}', space=vmem, size = 0x2000, scoped, tag = 'input window, operand 0']
    #allocation3 [shape = 's32[2]{0}', space=sflag, size = 0x8, scoped, tag = 'scoped memory for tpu_custom_call.1']
    #allocation4 [shape = 's32[2]{0}', space=sflag, size = 0x8, scoped, tag = 'scoped memory for tpu_custom_call.1']
    #allocation5 [shape = 'u8[8192]{0}', space=vmem, size = 0x2000, scoped, tag = 'output window, operand 0']
    %6 = vsyncpa [#allocation3], 0
    %s7 = scalar_lea.sflag [#allocation3], 1
    %8 = vsyncpa %s7, 0
    %9 = vsyncpa [#allocation4], 0
    %s10 = scalar_lea.sflag [#allocation4], 1
    %11 = vsyncpa %s10, 0
    loop: start=0, step=1, limit=4
    $region2: #{tpu_custom_call.1} parent=1 // loop_pre_header
      _
    $region3: #{tpu_custom_call.1} parent=1 // loop_header
      %s13 = sphi 0, %s17
      %p14 = scmp.ge.s32.totalorder %s13, 4
      %s20 = sphi 0, %s32
      %s21 = sphi 0, %s28
      %s22 = sphi 0, %s20
      %s23 = sphi 0, %s21
      %s24 = sphi 0, %s22
      %s25 = sphi 0, %s23
      %s37 = sphi 0, %s39
      %s40 = sphi 0, %s37
      %s41 = sphi 0, %s40
      %s57 = sphi 0, %s41
      %s65 = sphi 0, %s67
      %s68 = sphi 0, %s65
      %s69 = sphi 0, %s68
      %s85 = sphi 0, %s69
    $region4: #{tpu_custom_call.1} parent=1 // loop_header_branch
      %16 = sbr.rel (%p14) target = $region8
    $region5: #{tpu_custom_call.1} parent=1 // loop_body
      %s18 = ssub.s32 %s13, 1
      %s19 = ssub.s32 %s13, 2
      %s26 = sadd.s32 1, %s21
      %p27 = scmp.ge.s32.totalorder %s26, 2
      %s28 = scalar_select %p27, 0, %s26
      %s29 = sadd.s32 1, %s20
      %s30 = scalar_select %p27, %s29, %s20
      %p31 = scmp.ge.s32.totalorder %s30, 1
      %s32 = scalar_select %p31, 0, %s30
      %s33 = ssub.s32 %s20, %s32
      %s34 = ssub.s32 %s21, %s28
      %s35 = sor.u32 %s33, %s34
      %p36 = scmp.eq.s32.totalorder %s35, 0
      %s38 = sadd.s32 %s37, 1
      %s39 = scalar_select %p36, %s37, %s38
      %p42 = pneg %p36
      %p43 = scmp.eq.s32.totalorder %s13, 1
      %p44 = por %p42, %p43
      %p45 = scmp.ne.s32.totalorder %s37, %s40
      %p46 = scmp.eq.s32.totalorder %s13, 0
      %p47 = por %p45, %p46
      %p48 = scmp.ne.s32.totalorder %s37, %s40
      %p49 = scmp.eq.s32.totalorder %s18, 1
      %p50 = por %p48, %p49
      %p51 = scmp.ne.s32.totalorder %s40, %s41
      %p52 = scmp.eq.s32.totalorder %s18, 0
      %p53 = por %p51, %p52
      %p54 = scmp.ne.s32.totalorder %s40, %s41
      %p55 = scmp.eq.s32.totalorder %s19, 1
      %p56 = por %p54, %p55
      %p58 = scmp.ne.s32.totalorder %s41, %s57
      %p59 = scmp.eq.s32.totalorder %s19, 0
      %p60 = por %p58, %p59
      %s61 = ssub.s32 %s20, %s32
      %s62 = ssub.s32 %s21, %s28
      %s63 = sor.u32 %s61, %s62
      %p64 = scmp.eq.s32.totalorder %s63, 0
      %s66 = sadd.s32 %s65, 1
      %s67 = scalar_select %p64, %s65, %s66
      %p70 = pneg %p64
      %p71 = scmp.eq.s32.totalorder %s13, 1
      %p72 = por %p70, %p71
      %p73 = scmp.ne.s32.totalorder %s65, %s68
      %p74 = scmp.eq.s32.totalorder %s13, 0
      %p75 = por %p73, %p74
      %p76 = scmp.ne.s32.totalorder %s65, %s68
      %p77 = scmp.eq.s32.totalorder %s18, 1
      %p78 = por %p76, %p77
      %p79 = scmp.ne.s32.totalorder %s68, %s69
      %p80 = scmp.eq.s32.totalorder %s18, 0
      %p81 = por %p79, %p80
      %p82 = scmp.ne.s32.totalorder %s68, %s69
      %p83 = scmp.eq.s32.totalorder %s19, 1
      %p84 = por %p82, %p83
      %p86 = scmp.ne.s32.totalorder %s69, %s85
      %p87 = scmp.eq.s32.totalorder %s19, 0
      %p88 = por %p86, %p87
      %p89 = scmp.le.s32.totalorder 1, %s13
      %p90 = scmp.lt.s32.totalorder %s13, 3
      %p91 = pnand %p89, %p90
      %p92 = pneg %p91
      // Predicated region
      $region9: #{tpu_custom_call.1} parent=5 // pred_check
        _
      $region10: #{tpu_custom_call.1} parent=5 // pred_check_branch
        %94 = sbr.rel (%p91) target = $region12
      $region11: #{tpu_custom_call.1} parent=5 // pred_region
        %s95 = ssub.s32 %s13, 1
      $region12: #{tpu_custom_call.1} parent=5 // pred_fallthru
        _
      %p96 = scmp.lt.s32.totalorder %s13, 2
      // Predicated region
      $region13: #{tpu_custom_call.1} parent=5 // pred_check
        %p97 = pneg %p96
      $region14: #{tpu_custom_call.1} parent=5 // pred_check_branch
        %99 = sbr.rel (%p97) target = $region16
      $region15: #{tpu_custom_call.1} parent=5 // pred_region
        // Predicated region
        $region17: #{tpu_custom_call.1} parent=15 // pred_check
          %p100 = pneg %p47
        $region18: #{tpu_custom_call.1} parent=15 // pred_check_branch
          %102 = sbr.rel (%p100) target = $region20
        $region19: #{tpu_custom_call.1} parent=15 // pred_region
          %s103 = sand.u32 %s37, 1
          %s104 = scalar_lea.sflag [#allocation3], %s103
          %s105 = sand.u32 %s37, 1
          %s106 = smul.addr %s105, 8
          %s107 = scalar_lea.vmem [#allocation2], %s106
          %s108 = smul.u32 4, %s21
          %110 = vsyncadd %s104, 0
          %s111 = smul.addr %s20, 8
          %s112 = sadd.s32 %s108, %s111
          %s113 = smul.addr %s112, 2
          %s114 = scalar_lea.hbm %s0, %s113
          %s116 = sshll.u32 %s114, 4
          %s117 = int_to_ptr.hbm [resolvable:$true] %s116
          %s118 = sshll.u32 %s107, 4
          %s119 = int_to_ptr.vmem [resolvable:$true] %s118
          %121 = dma.hbm_to_vmem [thread:$0]  %s117, 128, %s119, %s104
        $region20: #{tpu_custom_call.1} parent=15 // pred_fallthru
          _
      $region16: #{tpu_custom_call.1} parent=5 // pred_fallthru
        _
      %p122 = scmp.le.s32.totalorder 1, %s13
      %p123 = scmp.lt.s32.totalorder %s13, 3
      %p124 = pnand %p122, %p123
      %p125 = pneg %p124
      // Predicated region
      $region21: #{tpu_custom_call.1} parent=5 // pred_check
        _
      $region22: #{tpu_custom_call.1} parent=5 // pred_check_branch
        %127 = sbr.rel (%p124) target = $region24
      $region23: #{tpu_custom_call.1} parent=5 // pred_region
        %s128 = ssub.s32 %s13, 1
        %s129 = sand.u32 %s40, 1
        %s130 = scalar_lea.sflag [#allocation3], %s129
        %s131 = sand.u32 %s40, 1
        %s132 = smul.addr %s131, 8
        %s133 = scalar_lea.vmem [#allocation2], %s132
        // Predicated region
        $region25: #{tpu_custom_call.1} parent=23 // pred_check
          %p134 = pneg %p53
        $region26: #{tpu_custom_call.1} parent=23 // pred_check_branch
          %136 = sbr.rel (%p134) target = $region28
        $region27: #{tpu_custom_call.1} parent=23 // pred_region
          %138 = dma.done %s130, 128
        $region28: #{tpu_custom_call.1} parent=23 // pred_fallthru
          _
        %s139 = sand.u32 %s40, 1
        %s140 = scalar_lea.sflag [#allocation3], %s139
        %s141 = sand.u32 %s40, 1
        %s142 = smul.addr %s141, 8
        %s143 = scalar_lea.vmem [#allocation2], %s142
        %p144 = pneg %p53
        %p145 = pneg %p50
        %p146 = pneg %p81
        %p147 = pneg %p78
        %s148 = sand.u32 %s68, 1
        %s149 = scalar_lea.sflag [#allocation4], %s148
        %s150 = sand.u32 %s68, 1
        %s151 = smul.addr %s150, 8
        %s152 = scalar_lea.vmem [#allocation5], %s151
        %s153 = smul.u32 4, %s23
        %s154 = smul.u32 4, %s23
        %v155 = vld [vmem:[%s133] sm:$0xff]
        %156 = vst [vmem:[%s152] sm:$0xff] %v155
        %s157 = sand.u32 %s68, 1
        %s158 = scalar_lea.sflag [#allocation4], %s157
        %s159 = sand.u32 %s68, 1
        %s160 = smul.addr %s159, 8
        %s161 = scalar_lea.vmem [#allocation5], %s160
        // Predicated region
        $region29: #{tpu_custom_call.1} parent=23 // pred_check
          %p162 = pneg %p78
        $region30: #{tpu_custom_call.1} parent=23 // pred_check_branch
          %164 = sbr.rel (%p162) target = $region32
        $region31: #{tpu_custom_call.1} parent=23 // pred_region
          %s165 = smul.u32 4, %s23
          %167 = vsyncadd %s158, 0
          %s168 = smul.addr %s22, 8
          %s169 = sadd.s32 %s165, %s168
          %s170 = smul.addr %s169, 2
          %s171 = scalar_lea.hbm %s1, %s170
          %s173 = sshll.u32 %s161, 4
          %s174 = int_to_ptr.vmem [resolvable:$true] %s173
          %s175 = sshll.u32 %s171, 4
          %s176 = int_to_ptr.hbm [resolvable:$true] %s175
          %178 = dma.vmem_to_hbm [thread:$0]  %s174, 128, %s176, %s158
        $region32: #{tpu_custom_call.1} parent=23 // pred_fallthru
          _
      $region24: #{tpu_custom_call.1} parent=5 // pred_fallthru
        _
      %p179 = scmp.le.s32.totalorder 2, %s13
      // Predicated region
      $region33: #{tpu_custom_call.1} parent=5 // pred_check
        %p180 = pneg %p179
      $region34: #{tpu_custom_call.1} parent=5 // pred_check_branch
        %182 = sbr.rel (%p180) target = $region36
      $region35: #{tpu_custom_call.1} parent=5 // pred_region
        %s183 = ssub.s32 %s13, 2
        // Predicated region
        $region37: #{tpu_custom_call.1} parent=35 // pred_check
          %p184 = pneg %p84
        $region38: #{tpu_custom_call.1} parent=35 // pred_check_branch
          %186 = sbr.rel (%p184) target = $region40
        $region39: #{tpu_custom_call.1} parent=35 // pred_region
          %s187 = sand.u32 %s69, 1
          %s188 = scalar_lea.sflag [#allocation4], %s187
          %s189 = sand.u32 %s69, 1
          %s190 = smul.addr %s189, 8
          %s191 = scalar_lea.vmem [#allocation5], %s190
          %193 = dma.done %s188, 128
        $region40: #{tpu_custom_call.1} parent=35 // pred_fallthru
          _
      $region36: #{tpu_custom_call.1} parent=5 // pred_fallthru
        _
    $region6: #{tpu_custom_call.1} parent=1 // loop_footer
      %s17 = sadd.s32 1, %s13
    $region7: #{tpu_custom_call.1} parent=1 // loop_footer_branch
      %12 = sbr.rel target = $region3
    $region8: #{tpu_custom_call.1} parent=1 // loop_exit
      _
    %194 = vsyncpa [#allocation3], 1
    %s195 = scalar_lea.sflag [#allocation3], 1
    %196 = vsyncpa %s195, 1
    %197 = vsyncpa [#allocation4], 1
    %s198 = scalar_lea.sflag [#allocation4], 1
    %199 = vsyncpa %s198, 1

</llo_original>
